<compile_context>
chip_gen: v7x
topology: tpu7x:2x2x1
jax: 0.10.0
libtpu: 0.0.40
codegen_flags: <defaults>
</compile_context>

<pallas_src>
import functools

import jax
import jax.numpy as jnp
from jax.experimental import pallas as pl
from jax.experimental.pallas import tpu as pltpu


def _batchnorm_kernel(x_ref, w_ref, b_ref, o_ref, *, eps: float):
    # x_ref: (B, TC, HW) native dtype; w_ref/b_ref: (1, TC, 1); o_ref: (B, TC, HW)
    x = x_ref[...]
    xf = x.astype(jnp.float32)

    n = xf.shape[0] * xf.shape[2]  # static: B * H*W elements per channel
    inv_n = 1.0 / float(n)

    # Per-channel mean over (batch, spatial): lane reduction then batch reduction.
    s = jnp.sum(jnp.sum(xf, axis=2, keepdims=True), axis=0, keepdims=True)  # (1,TC,1)
    mean = s * inv_n

    d = xf - mean
    ss = jnp.sum(jnp.sum(d * d, axis=2, keepdims=True), axis=0, keepdims=True)
    var = ss * inv_n  # unbiased=False, matches torch

    # Fold the affine transform into a single per-channel scale + shift.
    a = jax.lax.rsqrt(var + eps) * w_ref[...].astype(jnp.float32)  # (1, TC, 1)
    b = b_ref[...].astype(jnp.float32)                             # (1, TC, 1)

    o_ref[...] = (d * a + b).astype(o_ref.dtype)


def _choose_channel_tile(C: int, B: int, HW: int, dtype) -> int:
    """Channels per grid step: biggest tile within a small VMEM budget."""
    itemsize = jnp.dtype(dtype).itemsize
    sublane = max(8, 32 // itemsize)       # 8 (f32), 16 (bf16), 32 (int8/fp8)
    per_channel_bytes = B * HW * itemsize  # one channel's full reduction extent
    budget = 2 << 20                       # ~2 MiB native input tile per step
    tc = max(1, budget // max(1, per_channel_bytes))
    if tc >= C:
        return C
    # When tiling (tc < C) the block's second-to-last dim must be a sublane multiple.
    tc = max(sublane, (tc // sublane) * sublane)
    # TODO(synk): if B*H*W is so large that even `sublane` channels exceed VMEM,
    # switch to a two-pass (sum/sumsq accumulate, then streaming normalize) scheme.
    return min(tc, C)


def batchnorm_forward(x, weight, bias, *, eps: float = 1e-5):
    """BatchNorm forward matching the PyTorch module.

    Args:
      x: [B, C, H, W] input (NCHW, same as PyTorch).
      weight: [C] scale.
      bias: [C] shift.
    Returns:
      [B, C, H, W] normalized output, same dtype as x.
    """
    B, C, H, W = x.shape
    HW = H * W

    # Free views of the contiguous NCHW layout — no HBM transposes.
    x3 = x.reshape(B, C, HW)
    w3 = weight.reshape(1, C, 1)
    b3 = bias.reshape(1, C, 1)

    tc = _choose_channel_tile(C, B, HW, x.dtype)
    grid = (pl.cdiv(C, tc),)

    kernel = functools.partial(_batchnorm_kernel, eps=eps)

    out3 = pl.pallas_call(
        kernel,
        out_shape=jax.ShapeDtypeStruct((B, C, HW), x.dtype),
        grid=grid,
        in_specs=[
            pl.BlockSpec((B, tc, HW), lambda c: (0, c, 0)),
            pl.BlockSpec((1, tc, 1), lambda c: (0, c, 0)),
            pl.BlockSpec((1, tc, 1), lambda c: (0, c, 0)),
        ],
        out_specs=pl.BlockSpec((B, tc, HW), lambda c: (0, c, 0)),
        compiler_params=pltpu.CompilerParams(
            dimension_semantics=("parallel",),
            vmem_limit_bytes=32 << 20,
        ),
    )(x3, w3, b3)

    return out3.reshape(B, C, H, W)


if __name__ == "__main__":
    B, C, H, W = 2, 4, 16, 16
    eps = 1e-5

    key = jax.random.PRNGKey(0)
    x = jax.random.normal(key, (B, C, H, W), dtype=jnp.float32)

    # Deterministic parameter init per reset_parameters(): weight=1, bias=0.
    weight = jnp.ones((C,), dtype=jnp.float32)
    bias = jnp.zeros((C,), dtype=jnp.float32)

    out = batchnorm_forward(x, weight, bias, eps=eps)
    out = jax.block_until_ready(out)

    # Pure-JAX reference (matches torch: mean/var over (0,2,3), unbiased=False).
    mean = jnp.mean(x, axis=(0, 2, 3), keepdims=True)
    var = jnp.mean((x - mean) ** 2, axis=(0, 2, 3), keepdims=True)
    ref = (x - mean) / jnp.sqrt(var + eps)
    ref = ref * weight.reshape(1, C, 1, 1) + bias.reshape(1, C, 1, 1)

    assert out.shape == (B, C, H, W)
    assert out.dtype == x.dtype
    assert jnp.allclose(out, ref, atol=1e-5, rtol=1e-5), "mismatch vs reference"

    print("KERNEL_OK")
</pallas_src>

<mosaic_0001>
module attributes {stable_mosaic.version = 11 : i64} {
  func.func @_batchnorm_kernel(%arg0: i32, %arg1: memref<2x4x256xf32, #tpu.memory_space<vmem>>, %arg2: memref<1x4x1xf32, #tpu.memory_space<vmem>>, %arg3: memref<1x4x1xf32, #tpu.memory_space<vmem>>, %arg4: memref<2x4x256xf32, #tpu.memory_space<vmem>>) attributes {dimension_semantics = [#tpu.dimension_semantics<parallel>], iteration_bounds = array<i64: 1>, scalar_prefetch = 0 : i64, scratch_operands = 0 : i64, tpu.core_type = #tpu.core_type<tc>, window_params = [{transform_indices = @transform_0, window_bounds = array<i64: 2, 4, 256>}, {transform_indices = @transform_1, window_bounds = array<i64: 1, 4, 1>}, {transform_indices = @transform_2, window_bounds = array<i64: 1, 4, 1>}, {transform_indices = @transform_3, window_bounds = array<i64: 2, 4, 256>}]} {
    %c0 = arith.constant 0 : index
    %c0_0 = arith.constant 0 : index
    %c0_1 = arith.constant 0 : index
    %0 = vector.load %arg1[%c0, %c0_0, %c0_1] : memref<2x4x256xf32, #tpu.memory_space<vmem>>, vector<2x4x256xf32>
    %cst = arith.constant dense<0.000000e+00> : vector<2x4xf32>
    %1 = vector.multi_reduction <add>, %0, %cst [2] : vector<2x4x256xf32> to vector<2x4xf32>
    %2 = vector.shape_cast %1 : vector<2x4xf32> to vector<2x4x1xf32>
    %cst_2 = arith.constant dense<0.000000e+00> : vector<4x1xf32>
    %3 = vector.multi_reduction <add>, %2, %cst_2 [0] : vector<2x4x1xf32> to vector<4x1xf32>
    %4 = vector.shape_cast %3 : vector<4x1xf32> to vector<1x4x1xf32>
    %cst_3 = arith.constant 0.001953125 : f32
    %5 = vector.broadcast %cst_3 : f32 to vector<1x4x1xf32>
    %6 = arith.mulf %4, %5 : vector<1x4x1xf32>
    %7 = vector.broadcast %6 : vector<1x4x1xf32> to vector<2x4x256xf32>
    %8 = arith.subf %0, %7 : vector<2x4x256xf32>
    %9 = arith.mulf %8, %8 : vector<2x4x256xf32>
    %cst_4 = arith.constant dense<0.000000e+00> : vector<2x4xf32>
    %10 = vector.multi_reduction <add>, %9, %cst_4 [2] : vector<2x4x256xf32> to vector<2x4xf32>
    %11 = vector.shape_cast %10 : vector<2x4xf32> to vector<2x4x1xf32>
    %cst_5 = arith.constant dense<0.000000e+00> : vector<4x1xf32>
    %12 = vector.multi_reduction <add>, %11, %cst_5 [0] : vector<2x4x1xf32> to vector<4x1xf32>
    %13 = vector.shape_cast %12 : vector<4x1xf32> to vector<1x4x1xf32>
    %cst_6 = arith.constant 0.001953125 : f32
    %14 = vector.broadcast %cst_6 : f32 to vector<1x4x1xf32>
    %15 = arith.mulf %13, %14 : vector<1x4x1xf32>
    %cst_7 = arith.constant 9.99999974E-6 : f32
    %16 = vector.broadcast %cst_7 : f32 to vector<1x4x1xf32>
    %17 = arith.addf %15, %16 : vector<1x4x1xf32>
    %18 = math.rsqrt %17 : vector<1x4x1xf32>
    %c0_8 = arith.constant 0 : index
    %c0_9 = arith.constant 0 : index
    %c0_10 = arith.constant 0 : index
    %19 = vector.load %arg2[%c0_8, %c0_9, %c0_10] : memref<1x4x1xf32, #tpu.memory_space<vmem>>, vector<1x4x1xf32>
    %20 = arith.mulf %18, %19 : vector<1x4x1xf32>
    %c0_11 = arith.constant 0 : index
    %c0_12 = arith.constant 0 : index
    %c0_13 = arith.constant 0 : index
    %21 = vector.load %arg3[%c0_11, %c0_12, %c0_13] : memref<1x4x1xf32, #tpu.memory_space<vmem>>, vector<1x4x1xf32>
    %22 = vector.broadcast %20 : vector<1x4x1xf32> to vector<2x4x256xf32>
    %23 = arith.mulf %8, %22 : vector<2x4x256xf32>
    %24 = vector.broadcast %21 : vector<1x4x1xf32> to vector<2x4x256xf32>
    %25 = arith.addf %23, %24 : vector<2x4x256xf32>
    %c0_14 = arith.constant 0 : index
    %c0_15 = arith.constant 0 : index
    %c0_16 = arith.constant 0 : index
    %26 = vector.load %arg4[%c0_14, %c0_15, %c0_16] : memref<2x4x256xf32, #tpu.memory_space<vmem>>, vector<2x4x256xf32>
    tpu.vector_store %arg4[%c0_14, %c0_15, %c0_16], %25 {strides = array<i32>} : memref<2x4x256xf32, #tpu.memory_space<vmem>>, vector<2x4x256xf32>,
    return
  }
  func.func @transform_0(%arg0: i32) -> (i32, i32, i32) {
    %c0_i32 = arith.constant 0 : i32
    %c0_i32_0 = arith.constant 0 : i32
    %c0_i32_1 = arith.constant 0 : i32
    return %c0_i32, %arg0, %c0_i32_0 : i32, i32, i32
  }
  func.func @transform_1(%arg0: i32) -> (i32, i32, i32) {
    %c0_i32 = arith.constant 0 : i32
    %c0_i32_0 = arith.constant 0 : i32
    %c0_i32_1 = arith.constant 0 : i32
    return %c0_i32, %arg0, %c0_i32_0 : i32, i32, i32
  }
  func.func @transform_2(%arg0: i32) -> (i32, i32, i32) {
    %c0_i32 = arith.constant 0 : i32
    %c0_i32_0 = arith.constant 0 : i32
    %c0_i32_1 = arith.constant 0 : i32
    return %c0_i32, %arg0, %c0_i32_0 : i32, i32, i32
  }
  func.func @transform_3(%arg0: i32) -> (i32, i32, i32) {
    %c0_i32 = arith.constant 0 : i32
    %c0_i32_0 = arith.constant 0 : i32
    %c0_i32_1 = arith.constant 0 : i32
    return %c0_i32, %arg0, %c0_i32_0 : i32, i32, i32
  }
}

</mosaic_0001>

<llo_original>
// kernel: tpu_custom_call.1
$region0: #{tpu_custom_call.1}
  #allocation0 [shape = 'u32[]', space=smem, size = 0x4, offset = 0x4, fixed_abs, tag = 'smem constant byte address 0x4 - core index']
  #allocation1 [shape = 'u32[144,128]{1,0:T(1,128)}', space=vmem, size = 0x12000, scoped, tag = 'internal scratch']
  %s0 = inlined_call_operand.hbm [shape: f32[2,4,256], index: 0, kind: input, shape index: {}]
  %s1 = inlined_call_operand.vmem [shape: f32[1,4,1], index: 1, kind: input, shape index: {}]
  %s2 = inlined_call_operand.vmem [shape: f32[1,4,1], index: 2, kind: input, shape index: {}]
  %s3 = inlined_call_operand.hbm [shape: f32[2,4,256], index: 3, kind: output, shape index: {}]
  %s4 = sld [smem:[#allocation0]]
  $region26: #{tpu_custom_call.1} parent=0
    _
  %s6 = ssub.s32 1, %s4
  %s7 = scalar_select 0, %s6, %s4
  $region1: #{tpu_custom_call.1} parent=0
    #allocation2 [shape = 'u8[8192]{0}', space=vmem, size = 0x2000, scoped, tag = 'input window, operand 0, single buffered']
    #allocation3 [shape = 's32[1]{0}', space=sflag, size = 0x4, scoped, tag = 'scoped memory for tpu_custom_call.1']
    #allocation4 [shape = 's32[1]{0}', space=sflag, size = 0x4, scoped, tag = 'scoped memory for tpu_custom_call.1']
    #allocation5 [shape = 'u8[8192]{0}', space=vmem, size = 0x2000, scoped, tag = 'output window, operand 0, single buffered']
    %8 = vsyncpa [#allocation3], 0
    %9 = vsyncpa [#allocation4], 0
    // Predicated region
    $region2: #{tpu_custom_call.1} parent=1 // pred_check
      _
    $region3: #{tpu_custom_call.1} parent=1 // pred_check_branch
      %11 = sbr.rel (0) target = $region5
    $region4: #{tpu_custom_call.1} parent=1 // pred_region
      %s13 = ssub.s32 256, 256
      %14 = vsyncadd [#allocation3], %s13
      %s15 = sshll.u32 [#allocation2], 4
      %s16 = int_to_ptr.vmem [resolvable:$true] %s15
      %21 = dma.hbm_to_vmem [thread:$0]  %s0, 256, %s16, [#allocation3], 128, 128, 8
    $region5: #{tpu_custom_call.1} parent=1 // pred_fallthru
      _
    // Predicated region
    $region6: #{tpu_custom_call.1} parent=1 // pred_check
      _
    $region7: #{tpu_custom_call.1} parent=1 // pred_check_branch
      %23 = sbr.rel (0) target = $region9
    $region8: #{tpu_custom_call.1} parent=1 // pred_region
      _
    $region9: #{tpu_custom_call.1} parent=1 // pred_fallthru
      _
    // Predicated region
    $region10: #{tpu_custom_call.1} parent=1 // pred_check
      _
    $region11: #{tpu_custom_call.1} parent=1 // pred_check_branch
      %25 = sbr.rel (0) target = $region13
    $region12: #{tpu_custom_call.1} parent=1 // pred_region
      _
    $region13: #{tpu_custom_call.1} parent=1 // pred_fallthru
      _
    // Predicated region
    $region14: #{tpu_custom_call.1} parent=1 // pred_check
      _
    $region15: #{tpu_custom_call.1} parent=1 // pred_check_branch
      %27 = sbr.rel (0) target = $region17
    $region16: #{tpu_custom_call.1} parent=1 // pred_region
      %28 = dma.done [#allocation3], 256
    $region17: #{tpu_custom_call.1} parent=1 // pred_fallthru
      _
    %v29 = vld [vmem:[#allocation2] sm:$0xff]
    %v30 = vld [vmem:[#allocation2 + $0x8] sm:$0xff]
    %v33 = vcombine.high %v29, %v29
    %v34 = vcombine.high %v30, %v30
    %vm37 = vcmask 1043456
    %v38 = vsel %vm37, %v29, 0.0
    %v39 = vsel %vm37, %v33, 0.0
    %v40 = vadd.f32 %v38, %v39
    %41 = vadd.xlane.f32.xlu0 %v40
    %v42 = vpop.xlane.xlu0 %41
    %v43 = vsel %vm37, %v30, 0.0
    %v44 = vsel %vm37, %v34, 0.0
    %v45 = vadd.f32 %v43, %v44
    %46 = vadd.xlane.f32.xlu0 %v45
    %v47 = vpop.xlane.xlu0 %46
    %v48 = vsel %vm37, %v42, 0.0
    %v49 = vsel %vm37, %v47, 0.0
    %v50 = vadd.f32 %v48, %v49
    %v51 = vmul.f32 %v50, 0.001953125
    %v54 = vunpack.c.l.s4 839922192
    %v55 = vunpack.c.0.s8 %v54
    %v56 = vlaneseq
    %v57 = vshrl.u32 %v56, 7
    %v58 = vsub.s32 %v55, %v57
    %v59 = vrot.slane %v51, %v58
    %v61 = vsub.f32 %v29, %v59
    %v62 = vsub.f32 %v30, %v59
    %v63 = vmul.f32 %v61, %v61
    %v64 = vmul.f32 %v62, %v62
    %v67 = vcombine.high %v63, %v63
    %v68 = vcombine.high %v64, %v64
    %v71 = vsel %vm37, %v63, 0.0
    %v72 = vsel %vm37, %v67, 0.0
    %v73 = vadd.f32 %v71, %v72
    %74 = vadd.xlane.f32.xlu0 %v73
    %v75 = vpop.xlane.xlu0 %74
    %v76 = vsel %vm37, %v64, 0.0
    %v77 = vsel %vm37, %v68, 0.0
    %v78 = vadd.f32 %v76, %v77
    %79 = vadd.xlane.f32.xlu0 %v78
    %v80 = vpop.xlane.xlu0 %79
    %v81 = vsel %vm37, %v75, 0.0
    %v82 = vsel %vm37, %v80, 0.0
    %v83 = vadd.f32 %v81, %v82
    %v84 = vmul.f32 %v83, 0.001953125
    %v85 = vadd.f32 %v84, 1e-05
    %v86 = vrsqrt.pop %v85
    %v87 = vld [vmem:[%s1] sm:$0xf]
    %v88 = vmul.f32 %v86, %v87
    %v89 = vld [vmem:[%s2] sm:$0xf]
    %91 = vset.pattern.permute.xlu0 0
    %92 = vperm.xlu0 %91, %v88
    %v93 = vpop.permute.xlu0 %92
    %v95 = vunpack.c.l.s4 839922192
    %v96 = vunpack.c.0.s8 %v95
    %v97 = vlaneseq
    %v98 = vshrl.u32 %v97, 7
    %v99 = vsub.s32 %v96, %v98
    %v100 = vrot.slane %v93, %v99
    %v102 = vmul.f32 %v61, %v100
    %v103 = vmul.f32 %v62, %v100
    %105 = vset.pattern.permute.xlu0 0
    %106 = vperm.xlu0 %105, %v89
    %v107 = vpop.permute.xlu0 %106
    %v109 = vunpack.c.l.s4 839922192
    %v110 = vunpack.c.0.s8 %v109
    %v111 = vlaneseq
    %v112 = vshrl.u32 %v111, 7
    %v113 = vsub.s32 %v110, %v112
    %v114 = vrot.slane %v107, %v113
    %v116 = vadd.f32 %v102, %v114
    %v117 = vadd.f32 %v103, %v114
    %118 = vst [vmem:[#allocation5] sm:$0xff] %v116
    %119 = vst [vmem:[#allocation5 + $0x8] sm:$0xff] %v117
    // Predicated region
    $region18: #{tpu_custom_call.1} parent=1 // pred_check
      _
    $region19: #{tpu_custom_call.1} parent=1 // pred_check_branch
      %121 = sbr.rel (0) target = $region21
    $region20: #{tpu_custom_call.1} parent=1 // pred_region
      %s123 = ssub.s32 256, 256
      %124 = vsyncadd [#allocation4], %s123
      %s125 = sshll.u32 [#allocation5], 4
      %s126 = int_to_ptr.vmem [resolvable:$true] %s125
      %131 = dma.vmem_to_hbm [thread:$0]  %s126, 256, %s3, [#allocation4], 128, 128, 8
    $region21: #{tpu_custom_call.1} parent=1 // pred_fallthru
      _
    // Predicated region
    $region22: #{tpu_custom_call.1} parent=1 // pred_check
      _
    $region23: #{tpu_custom_call.1} parent=1 // pred_check_branch
      %133 = sbr.rel (0) target = $region25
    $region24: #{tpu_custom_call.1} parent=1 // pred_region
      %134 = dma.done [#allocation4], 256
    $region25: #{tpu_custom_call.1} parent=1 // pred_fallthru
      _
    %135 = vsyncpa [#allocation3], 1
    %136 = vsyncpa [#allocation4], 1

</llo_original>
